<compile_context>
chip_gen: v7x
topology: tpu7x:2x2x1
jax: 0.10.0
libtpu: 0.0.40
codegen_flags: <defaults>
</compile_context>

<pallas_src>
import functools

import jax
import jax.numpy as jnp
from jax.experimental import pallas as pl
from jax.experimental.pallas import tpu as pltpu


def _sobel_kernel(x_ref, o_ref, *, W):
    """One block: (B, H*W); each sublane row is one flattened (H, W) plane.

    Separable Sobel with zero padding done in-register:
      row pass   : d = x[j-1] - x[j+1],   t = x[j-1] + 2*x[j] + x[j+1]
      column pass: gx = d[i-1] + 2*d[i] + d[i+1],   gy = t[i-1] - t[i+1]
    Neighbour reads are lane rotations masked at the plane borders (the mask
    zeros exactly the wrapped-in lanes, reproducing Conv2d's zero padding).
    """
    _, HW = x_ref.shape
    x = x_ref[...].astype(jnp.float32)

    # Border masks, built once at (1, HW); the selects broadcast them over B.
    lane = jax.lax.broadcasted_iota(jnp.int32, (1, HW), 1)
    col = (lane & (W - 1)) if (W & (W - 1)) == 0 else (lane % W)
    has_left = col != 0            # left neighbour inside the image row
    has_right = col != W - 1       # right neighbour inside the image row
    has_up = lane >= W             # image row above exists
    has_down = lane < HW - W       # image row below exists

    # Row pass: horizontal neighbours via lane rotation (wrap masked to zero).
    xl = jnp.where(has_left, pltpu.roll(x, shift=1, axis=1), 0.0)
    xr = jnp.where(has_right, pltpu.roll(x, shift=HW - 1, axis=1), 0.0)
    d = xl - xr                    # becomes gx after the column pass
    t = xl + 2.0 * x + xr          # becomes gy after the column pass

    # Column pass: a +-W lane rotation moves one image row within the plane.
    # TODO(synk): on v7x with W a multiple of 128, switch to a (N*C*H_t, W)
    # layout so these vertical taps become sublane-offset reads (no XLU).
    gx = 2.0 * d
    gx = gx + jnp.where(has_up, pltpu.roll(d, shift=W, axis=1), 0.0)
    gx = gx + jnp.where(has_down, pltpu.roll(d, shift=HW - W, axis=1), 0.0)
    gy = jnp.where(has_up, pltpu.roll(t, shift=W, axis=1), 0.0)
    gy = gy - jnp.where(has_down, pltpu.roll(t, shift=HW - W, axis=1), 0.0)

    # sqrt goes to the EUP slot (effectively free next to the VALU work).
    o_ref[...] = jnp.sqrt(gx * gx + gy * gy + 1e-8).astype(o_ref.dtype)


def _floor8(n):
    return (n // 8) * 8


def _planes_per_block(P, plane_bytes, target_bytes=2 << 20, min_block_bytes=1 << 20):
    """Planes (sublane rows) per grid step.

    The sublane block size must be a multiple of 8 or the full extent P.
    A fixed block + pl.cdiv grid is used (no divisibility requirement):
    planes are independent rows, so the ragged last block is safe — extra
    output rows are clipped and extra input rows only feed discarded rows.
    """
    if P <= 8:
        return P                   # full extent (allowed even if not % 8)
    # TODO(synk): planes too large for even an 8-plane block (e.g. 4K frames
    # on v7x's 64 MiB VMEM) need within-plane tiling: an (N*C, H, W) layout
    # with (1, h_tile, W) main blocks plus two (1, 8, W) halo blocks
    # (clamped index_maps + image-border masks), which also makes the
    # vertical taps plain sublane-offset reads.
    # Largest multiple of 8 that keeps one block near the ~2 MiB sweet spot.
    b = max(8, _floor8(min(target_bytes // plane_bytes, P)))
    # Guarantee >= 2 grid steps so ("parallel",) can shard across both v7x
    # TensorCores (no-op on single-core v5e/v6e).
    b = min(b, max(8, _floor8(P // 2)))
    # Prefer ~8 steps when each block still holds >= ~1 MiB (amortizes the
    # ~0.35 us per-step overhead while keeping the DMA pipeline busy).
    b8 = max(8, _floor8(pl.cdiv(P, 8)))
    if b8 * plane_bytes >= min_block_bytes:
        b = min(b, b8)
    return b


def sobel_conv(x):
    """x: (N, C, H, W) float -> (N, C, H, W) Sobel gradient magnitude."""
    N, C, H, W = x.shape
    P, HW = N * C, H * W
    xf = x.reshape(P, HW)                         # metadata-only reshape
    itemsize = x.dtype.itemsize
    B = _planes_per_block(P, HW * itemsize)
    grid = (pl.cdiv(P, B),)

    # VMEM budget: double-buffered input + output blocks plus ~8 live f32
    # compute temporaries, with a little headroom; capped at v7x's 64 MiB.
    blk_io = B * HW * itemsize
    blk_f32 = B * HW * 4
    vmem_limit = int(min(max(4 * blk_io + 8 * blk_f32 + (4 << 20), 8 << 20),
                         64 << 20))

    out = pl.pallas_call(
        functools.partial(_sobel_kernel, W=W),
        out_shape=jax.ShapeDtypeStruct((P, HW), x.dtype),
        grid=grid,
        in_specs=[pl.BlockSpec((B, HW), lambda i: (i, 0))],
        out_specs=pl.BlockSpec((B, HW), lambda i: (i, 0)),
        compiler_params=pltpu.CompilerParams(
            dimension_semantics=("parallel",),
            vmem_limit_bytes=vmem_limit,
        ),
        cost_estimate=pl.CostEstimate(
            flops=16 * P * HW,
            transcendentals=P * HW,
            bytes_accessed=2 * P * HW * int(itemsize),
        ),
    )(xf)
    return out.reshape(N, C, H, W)


def sobel_conv_ref(x):
    """Pure-JAX reference (cross-correlation with zero padding, like Conv2d)."""
    N, C, H, W = x.shape
    p = jnp.pad(x, ((0, 0), (0, 0), (1, 1), (1, 1)))
    gx = (
        (p[:, :, 0:H, 0:W] - p[:, :, 0:H, 2:W + 2])
        + 2.0 * (p[:, :, 1:H + 1, 0:W] - p[:, :, 1:H + 1, 2:W + 2])
        + (p[:, :, 2:H + 2, 0:W] - p[:, :, 2:H + 2, 2:W + 2])
    )
    gy = (
        p[:, :, 0:H, 0:W] + 2.0 * p[:, :, 0:H, 1:W + 1] + p[:, :, 0:H, 2:W + 2]
        - p[:, :, 2:H + 2, 0:W] - 2.0 * p[:, :, 2:H + 2, 1:W + 1]
        - p[:, :, 2:H + 2, 2:W + 2]
    )
    return jnp.sqrt(gx * gx + gy * gy + 1e-8)


if __name__ == "__main__":
    k1, k2 = jax.random.split(jax.random.PRNGKey(0))

    # Primary shape implied by the module usage.
    x1 = jax.random.normal(k1, (2, 4, 16, 16), dtype=jnp.float32)
    out1 = jax.block_until_ready(sobel_conv(x1))
    assert out1.shape == x1.shape
    assert jnp.allclose(out1, sobel_conv_ref(x1), atol=1e-5, rtol=1e-5)

    # Second shape exercises the cdiv grid with a ragged last block (P = 15)
    # and the non-power-of-two column mask path (W = 24, HW = 384 lane-aligned).
    x2 = jax.random.normal(k2, (3, 5, 16, 24), dtype=jnp.float32)
    out2 = jax.block_until_ready(sobel_conv(x2))
    assert out2.shape == x2.shape
    assert jnp.allclose(out2, sobel_conv_ref(x2), atol=1e-5, rtol=1e-5)

    print("KERNEL_OK")
</pallas_src>

<mosaic_0001>
module attributes {stable_mosaic.version = 11 : i64} {
  func.func @_sobel_kernel(%arg0: i32, %arg1: memref<8x256xf32, #tpu.memory_space<vmem>>, %arg2: memref<8x256xf32, #tpu.memory_space<vmem>>) attributes {dimension_semantics = [#tpu.dimension_semantics<parallel>], iteration_bounds = array<i64: 1>, scalar_prefetch = 0 : i64, scratch_operands = 0 : i64, tpu.core_type = #tpu.core_type<tc>, window_params = [{transform_indices = @transform_0, window_bounds = array<i64: 8, 256>}, {transform_indices = @transform_1, window_bounds = array<i64: 8, 256>}]} {
    %c0 = arith.constant 0 : index
    %c0_0 = arith.constant 0 : index
    %0 = vector.load %arg1[%c0, %c0_0] : memref<8x256xf32, #tpu.memory_space<vmem>>, vector<8x256xf32>
    %1 = tpu.iota {dimensions = array<i32: 1>} : vector<1x256xi32>
    %c15_i32 = arith.constant 15 : i32
    %2 = vector.broadcast %c15_i32 : i32 to vector<1x256xi32>
    %3 = arith.andi %1, %2 : vector<1x256xi32>
    %c0_i32 = arith.constant 0 : i32
    %4 = vector.broadcast %c0_i32 : i32 to vector<1x256xi32>
    %5 = arith.cmpi ne, %3, %4 : vector<1x256xi32>
    %c15_i32_1 = arith.constant 15 : i32
    %6 = vector.broadcast %c15_i32_1 : i32 to vector<1x256xi32>
    %7 = arith.cmpi ne, %3, %6 : vector<1x256xi32>
    %c16_i32 = arith.constant 16 : i32
    %8 = vector.broadcast %c16_i32 : i32 to vector<1x256xi32>
    %9 = arith.cmpi sge, %1, %8 : vector<1x256xi32>
    %c240_i32 = arith.constant 240 : i32
    %10 = vector.broadcast %c240_i32 : i32 to vector<1x256xi32>
    %11 = arith.cmpi slt, %1, %10 : vector<1x256xi32>
    %c1_i32 = arith.constant 1 : i32
    %12 = tpu.dynamic_rotate %0 by %c1_i32 dim 1 : vector<8x256xf32>, i32 -> vector<8x256xf32>
    %cst = arith.constant 0.000000e+00 : f32
    %13 = vector.shape_cast %5 : vector<1x256xi1> to vector<1x256xi1>
    %14 = vector.broadcast %13 : vector<1x256xi1> to vector<8x256xi1>
    %15 = vector.broadcast %cst : f32 to vector<8x256xf32>
    %16 = arith.select %14, %12, %15 : vector<8x256xi1>, vector<8x256xf32>
    %c255_i32 = arith.constant 255 : i32
    %17 = tpu.dynamic_rotate %0 by %c255_i32 dim 1 : vector<8x256xf32>, i32 -> vector<8x256xf32>
    %cst_2 = arith.constant 0.000000e+00 : f32
    %18 = vector.shape_cast %7 : vector<1x256xi1> to vector<1x256xi1>
    %19 = vector.broadcast %18 : vector<1x256xi1> to vector<8x256xi1>
    %20 = vector.broadcast %cst_2 : f32 to vector<8x256xf32>
    %21 = arith.select %19, %17, %20 : vector<8x256xi1>, vector<8x256xf32>
    %22 = arith.subf %16, %21 : vector<8x256xf32>
    %cst_3 = arith.constant 2.000000e+00 : f32
    %23 = vector.broadcast %cst_3 : f32 to vector<8x256xf32>
    %24 = arith.mulf %23, %0 : vector<8x256xf32>
    %25 = arith.addf %16, %24 : vector<8x256xf32>
    %26 = arith.addf %25, %21 : vector<8x256xf32>
    %cst_4 = arith.constant 2.000000e+00 : f32
    %27 = vector.broadcast %cst_4 : f32 to vector<8x256xf32>
    %28 = arith.mulf %27, %22 : vector<8x256xf32>
    %c16_i32_5 = arith.constant 16 : i32
    %29 = tpu.dynamic_rotate %22 by %c16_i32_5 dim 1 : vector<8x256xf32>, i32 -> vector<8x256xf32>
    %cst_6 = arith.constant 0.000000e+00 : f32
    %30 = vector.shape_cast %9 : vector<1x256xi1> to vector<1x256xi1>
    %31 = vector.broadcast %30 : vector<1x256xi1> to vector<8x256xi1>
    %32 = vector.broadcast %cst_6 : f32 to vector<8x256xf32>
    %33 = arith.select %31, %29, %32 : vector<8x256xi1>, vector<8x256xf32>
    %34 = arith.addf %28, %33 : vector<8x256xf32>
    %c240_i32_7 = arith.constant 240 : i32
    %35 = tpu.dynamic_rotate %22 by %c240_i32_7 dim 1 : vector<8x256xf32>, i32 -> vector<8x256xf32>
    %cst_8 = arith.constant 0.000000e+00 : f32
    %36 = vector.shape_cast %11 : vector<1x256xi1> to vector<1x256xi1>
    %37 = vector.broadcast %36 : vector<1x256xi1> to vector<8x256xi1>
    %38 = vector.broadcast %cst_8 : f32 to vector<8x256xf32>
    %39 = arith.select %37, %35, %38 : vector<8x256xi1>, vector<8x256xf32>
    %40 = arith.addf %34, %39 : vector<8x256xf32>
    %c16_i32_9 = arith.constant 16 : i32
    %41 = tpu.dynamic_rotate %26 by %c16_i32_9 dim 1 : vector<8x256xf32>, i32 -> vector<8x256xf32>
    %cst_10 = arith.constant 0.000000e+00 : f32
    %42 = vector.shape_cast %9 : vector<1x256xi1> to vector<1x256xi1>
    %43 = vector.broadcast %42 : vector<1x256xi1> to vector<8x256xi1>
    %44 = vector.broadcast %cst_10 : f32 to vector<8x256xf32>
    %45 = arith.select %43, %41, %44 : vector<8x256xi1>, vector<8x256xf32>
    %c240_i32_11 = arith.constant 240 : i32
    %46 = tpu.dynamic_rotate %26 by %c240_i32_11 dim 1 : vector<8x256xf32>, i32 -> vector<8x256xf32>
    %cst_12 = arith.constant 0.000000e+00 : f32
    %47 = vector.shape_cast %11 : vector<1x256xi1> to vector<1x256xi1>
    %48 = vector.broadcast %47 : vector<1x256xi1> to vector<8x256xi1>
    %49 = vector.broadcast %cst_12 : f32 to vector<8x256xf32>
    %50 = arith.select %48, %46, %49 : vector<8x256xi1>, vector<8x256xf32>
    %51 = arith.subf %45, %50 : vector<8x256xf32>
    %52 = arith.mulf %40, %40 : vector<8x256xf32>
    %53 = arith.mulf %51, %51 : vector<8x256xf32>
    %54 = arith.addf %52, %53 : vector<8x256xf32>
    %cst_13 = arith.constant 9.99999993E-9 : f32
    %55 = vector.broadcast %cst_13 : f32 to vector<8x256xf32>
    %56 = arith.addf %54, %55 : vector<8x256xf32>
    %57 = math.sqrt %56 : vector<8x256xf32>
    %c0_14 = arith.constant 0 : index
    %c0_15 = arith.constant 0 : index
    %58 = vector.load %arg2[%c0_14, %c0_15] : memref<8x256xf32, #tpu.memory_space<vmem>>, vector<8x256xf32>
    tpu.vector_store %arg2[%c0_14, %c0_15], %57 {strides = array<i32>} : memref<8x256xf32, #tpu.memory_space<vmem>>, vector<8x256xf32>,
    return
  }
  func.func @transform_0(%arg0: i32) -> (i32, i32) {
    %c0_i32 = arith.constant 0 : i32
    %c0_i32_0 = arith.constant 0 : i32
    return %arg0, %c0_i32 : i32, i32
  }
  func.func @transform_1(%arg0: i32) -> (i32, i32) {
    %c0_i32 = arith.constant 0 : i32
    %c0_i32_0 = arith.constant 0 : i32
    return %arg0, %c0_i32 : i32, i32
  }
}

</mosaic_0001>

<llo_original>
// kernel: tpu_custom_call.1
$region0: #{tpu_custom_call.1}
  #allocation0 [shape = 'u32[]', space=smem, size = 0x4, offset = 0x4, fixed_abs, tag = 'smem constant byte address 0x4 - core index']
  #allocation1 [shape = 'u32[144,128]{1,0:T(1,128)}', space=vmem, size = 0x12000, scoped, tag = 'internal scratch']
  %s0 = inlined_call_operand.hbm [shape: f32[8,256], index: 0, kind: input, shape index: {}]
  %s1 = inlined_call_operand.hbm [shape: f32[8,256], index: 1, kind: output, shape index: {}]
  %s2 = sld [smem:[#allocation0]]
  $region18: #{tpu_custom_call.1} parent=0
    _
  %s4 = ssub.s32 1, %s2
  %s5 = scalar_select 0, %s4, %s2
  $region1: #{tpu_custom_call.1} parent=0
    #allocation2 [shape = 'u8[8192]{0}', space=vmem, size = 0x2000, scoped, tag = 'input window, operand 0, single buffered']
    #allocation3 [shape = 's32[1]{0}', space=sflag, size = 0x4, scoped, tag = 'scoped memory for tpu_custom_call.1']
    #allocation4 [shape = 's32[1]{0}', space=sflag, size = 0x4, scoped, tag = 'scoped memory for tpu_custom_call.1']
    #allocation5 [shape = 'u8[8192]{0}', space=vmem, size = 0x2000, scoped, tag = 'output window, operand 0, single buffered']
    %6 = vsyncpa [#allocation3], 0
    %7 = vsyncpa [#allocation4], 0
    // Predicated region
    $region2: #{tpu_custom_call.1} parent=1 // pred_check
      _
    $region3: #{tpu_custom_call.1} parent=1 // pred_check_branch
      %9 = sbr.rel (0) target = $region5
    $region4: #{tpu_custom_call.1} parent=1 // pred_region
      %s11 = ssub.s32 256, 256
      %12 = vsyncadd [#allocation3], %s11
      %s14 = sshll.u32 [#allocation2], 4
      %s15 = int_to_ptr.vmem [resolvable:$true] %s14
      %17 = dma.hbm_to_vmem [thread:$0]  %s0, 256, %s15, [#allocation3]
    $region5: #{tpu_custom_call.1} parent=1 // pred_fallthru
      _
    // Predicated region
    $region6: #{tpu_custom_call.1} parent=1 // pred_check
      _
    $region7: #{tpu_custom_call.1} parent=1 // pred_check_branch
      %19 = sbr.rel (0) target = $region9
    $region8: #{tpu_custom_call.1} parent=1 // pred_region
      %20 = dma.done [#allocation3], 256
    $region9: #{tpu_custom_call.1} parent=1 // pred_fallthru
      _
    %v21 = vld [vmem:[#allocation2] sm:$0xff]
    %v22 = vld [vmem:[#allocation2 + $0x8] sm:$0xff]
    %v23 = vlaneseq
    %v24 = vand.u32 %v23, 127
    %v25 = vadd.s32 %v24, 128
    %v26 = vand.u32 %v24, 15
    %v27 = vand.u32 %v25, 15
    %vm28 = vcmp.ne.s32.totalorder %v26, 0
    %vm29 = vcmp.ne.s32.totalorder %v27, 0
    %vm30 = vcmp.ne.s32.totalorder %v26, 15
    %vm31 = vcmp.ne.s32.totalorder %v27, 15
    %vm32 = vcmp.ge.s32.totalorder %v24, 16
    %vm33 = vcmp.ge.s32.totalorder %v25, 16
    %vm34 = vcmp.lt.s32.totalorder %v24, 240
    %vm35 = vcmp.lt.s32.totalorder %v25, 240
    %36 = vrot.lane.b32.xlu0 %v21, 1
    %v37 = vpop.permute.xlu0 %36
    %38 = vrot.lane.b32.xlu0 %v22, 1
    %v39 = vpop.permute.xlu0 %38
    %vm40 = vcmp.lt.s32.totalorder %v24, 1
    %v41 = vsel %vm40, %v37, %v39
    %v42 = vsel %vm40, %v39, %v37
    %v43 = vsel %vm28, 1, 0
    %v44 = vsel %vm29, 1, 0
    %vm45 = vcmp.eq.s32.totalorder %v43, 1
    %vm46 = vcmp.eq.s32.totalorder %v44, 1
    %v47 = vsel %vm45, %v42, 0.0
    %v48 = vsel %vm46, %v41, 0.0
    %49 = vrot.lane.b32.xlu0 %v21, 127
    %v50 = vpop.permute.xlu0 %49
    %51 = vrot.lane.b32.xlu0 %v22, 127
    %v52 = vpop.permute.xlu0 %51
    %vm53 = vcmp.lt.s32.totalorder %v24, 127
    %v54 = vsel %vm53, %v50, %v52
    %v55 = vsel %vm53, %v52, %v50
    %v56 = vsel %vm30, 1, 0
    %v57 = vsel %vm31, 1, 0
    %vm58 = vcmp.eq.s32.totalorder %v56, 1
    %vm59 = vcmp.eq.s32.totalorder %v57, 1
    %v60 = vsel %vm58, %v54, 0.0
    %v61 = vsel %vm59, %v55, 0.0
    %v62 = vsub.f32 %v47, %v60
    %v63 = vsub.f32 %v48, %v61
    %v64 = vmul.f32 %v21, 2.0
    %v65 = vmul.f32 %v22, 2.0
    %v66 = vadd.f32 %v47, %v64
    %v67 = vadd.f32 %v48, %v65
    %v68 = vadd.f32 %v66, %v60
    %v69 = vadd.f32 %v67, %v61
    %v70 = vmul.f32 %v62, 2.0
    %v71 = vmul.f32 %v63, 2.0
    %72 = vrot.lane.b32.xlu0 %v62, 16
    %v73 = vpop.permute.xlu0 %72
    %74 = vrot.lane.b32.xlu0 %v63, 16
    %v75 = vpop.permute.xlu0 %74
    %vm76 = vcmp.lt.s32.totalorder %v24, 16
    %v77 = vsel %vm76, %v73, %v75
    %v78 = vsel %vm76, %v75, %v73
    %v79 = vsel %vm32, 1, 0
    %v80 = vsel %vm33, 1, 0
    %vm81 = vcmp.eq.s32.totalorder %v79, 1
    %vm82 = vcmp.eq.s32.totalorder %v80, 1
    %v83 = vsel %vm81, %v78, 0.0
    %v84 = vsel %vm82, %v77, 0.0
    %v85 = vadd.f32 %v70, %v83
    %v86 = vadd.f32 %v71, %v84
    %87 = vrot.lane.b32.xlu0 %v62, 112
    %v88 = vpop.permute.xlu0 %87
    %89 = vrot.lane.b32.xlu0 %v63, 112
    %v90 = vpop.permute.xlu0 %89
    %vm91 = vcmp.lt.s32.totalorder %v24, 112
    %v92 = vsel %vm91, %v88, %v90
    %v93 = vsel %vm91, %v90, %v88
    %v94 = vsel %vm34, 1, 0
    %v95 = vsel %vm35, 1, 0
    %vm96 = vcmp.eq.s32.totalorder %v94, 1
    %vm97 = vcmp.eq.s32.totalorder %v95, 1
    %v98 = vsel %vm96, %v92, 0.0
    %v99 = vsel %vm97, %v93, 0.0
    %v100 = vadd.f32 %v85, %v98
    %v101 = vadd.f32 %v86, %v99
    %102 = vrot.lane.b32.xlu0 %v68, 16
    %v103 = vpop.permute.xlu0 %102
    %104 = vrot.lane.b32.xlu0 %v69, 16
    %v105 = vpop.permute.xlu0 %104
    %v106 = vsel %vm76, %v103, %v105
    %v107 = vsel %vm76, %v105, %v103
    %v108 = vsel %vm81, %v107, 0.0
    %v109 = vsel %vm82, %v106, 0.0
    %110 = vrot.lane.b32.xlu0 %v68, 112
    %v111 = vpop.permute.xlu0 %110
    %112 = vrot.lane.b32.xlu0 %v69, 112
    %v113 = vpop.permute.xlu0 %112
    %v114 = vsel %vm91, %v111, %v113
    %v115 = vsel %vm91, %v113, %v111
    %v116 = vsel %vm96, %v114, 0.0
    %v117 = vsel %vm97, %v115, 0.0
    %v118 = vsub.f32 %v108, %v116
    %v119 = vsub.f32 %v109, %v117
    %v120 = vmul.f32 %v100, %v100
    %v121 = vmul.f32 %v101, %v101
    %v122 = vmul.f32 %v118, %v118
    %v123 = vmul.f32 %v119, %v119
    %v124 = vadd.f32 %v120, %v122
    %v125 = vadd.f32 %v121, %v123
    %v126 = vadd.f32 %v124, 1e-08
    %v127 = vadd.f32 %v125, 1e-08
    %v128 = vrsqrt.pop %v126
    %v129 = vmul.f32 %v126, %v128
    %vm130 = vcmp.eq.f32.partialorder %v126, inf
    %v131 = vsel %vm130, %v126, %v129
    %vm132 = vcmp.eq.f32.partialorder %v126, 0.0
    %v133 = vand.u32 %v126, 2147483648
    %v134 = vsel %vm132, %v133, %v131
    %v135 = vrsqrt.pop %v127
    %v136 = vmul.f32 %v127, %v135
    %vm137 = vcmp.eq.f32.partialorder %v127, inf
    %v138 = vsel %vm137, %v127, %v136
    %vm139 = vcmp.eq.f32.partialorder %v127, 0.0
    %v140 = vand.u32 %v127, 2147483648
    %v141 = vsel %vm139, %v140, %v138
    %142 = vst [vmem:[#allocation5] sm:$0xff] %v134
    %143 = vst [vmem:[#allocation5 + $0x8] sm:$0xff] %v141
    // Predicated region
    $region10: #{tpu_custom_call.1} parent=1 // pred_check
      _
    $region11: #{tpu_custom_call.1} parent=1 // pred_check_branch
      %145 = sbr.rel (0) target = $region13
    $region12: #{tpu_custom_call.1} parent=1 // pred_region
      %s147 = ssub.s32 256, 256
      %148 = vsyncadd [#allocation4], %s147
      %s150 = sshll.u32 [#allocation5], 4
      %s151 = int_to_ptr.vmem [resolvable:$true] %s150
      %153 = dma.vmem_to_hbm [thread:$0]  %s151, 256, %s1, [#allocation4]
    $region13: #{tpu_custom_call.1} parent=1 // pred_fallthru
      _
    // Predicated region
    $region14: #{tpu_custom_call.1} parent=1 // pred_check
      _
    $region15: #{tpu_custom_call.1} parent=1 // pred_check_branch
      %155 = sbr.rel (0) target = $region17
    $region16: #{tpu_custom_call.1} parent=1 // pred_region
      %156 = dma.done [#allocation4], 256
    $region17: #{tpu_custom_call.1} parent=1 // pred_fallthru
      _
    %157 = vsyncpa [#allocation3], 1
    %158 = vsyncpa [#allocation4], 1

</llo_original>
